<compile_context>
chip_gen: v6e
topology: v6e:2x2x1
jax: 0.10.0
libtpu: 0.0.40
codegen_flags: <defaults>
</compile_context>

<pallas_src>
import functools

import jax
import jax.numpy as jnp
from jax.experimental import pallas as pl
from jax.experimental.pallas import tpu as pltpu


def _round_up(x, m):
    return ((x + m - 1) // m) * m


def recognition_kernel(x_ref, w1_ref, b1_ref, w2_ref, b2_ref, out_ref):
    # Layer 1: Linear(8 -> H_pad) + ReLU.  Padded input cols / W1 rows are zero.
    h1 = jnp.dot(x_ref[...], w1_ref[...], preferred_element_type=jnp.float32) + b1_ref[...]
    h1 = jnp.maximum(h1, 0.0)
    # Layer 2: Linear(H_pad -> H_pad) + ReLU.  Padded rows/cols of W2 are zero.
    h2 = jnp.dot(h1, w2_ref[...], preferred_element_type=jnp.float32) + b2_ref[...]
    out_ref[...] = jnp.maximum(h2, 0.0).astype(out_ref.dtype)


def prepare_params(w1, b1, w2, b2):
    """One-time weight/bias padding (do NOT call per forward).

    w1: (6, H) stored as (in, out); b1: (1, H) or (H,); w2: (H, H); b2: (1, H) or (H,).
    Returns lane/sublane-padded params (F_pad=8 input rows, H_pad=mult-of-128 cols).
    Zero padding is exact under matmul + bias + ReLU.
    """
    f_in, H = w1.shape
    F_pad = _round_up(f_in, 8)
    H_pad = _round_up(H, 128)
    w1_p = jnp.pad(w1, ((0, F_pad - f_in), (0, H_pad - H))).astype(jnp.float32)
    b1_p = jnp.pad(b1.reshape(1, H), ((0, 0), (0, H_pad - H))).astype(jnp.float32)
    w2_p = jnp.pad(w2, ((0, H_pad - H), (0, H_pad - H))).astype(jnp.float32)
    b2_p = jnp.pad(b2.reshape(1, H), ((0, 0), (0, H_pad - H))).astype(jnp.float32)
    return w1_p, b1_p, w2_p, b2_p


def _pick_tile_b(B, tile_b):
    # Prefer >=2 grid steps (so v7x megacore sharding has something to split),
    # capped at tile_b, always a multiple of 8 sublanes.
    half = max(8, _round_up((B + 1) // 2, 8))
    return min(tile_b, half)


@functools.partial(jax.jit, static_argnames=("hidden_dim", "tile_b", "trim_output"))
def recognition_forward(observed_data, uncertainties, w1_p, b1_p, w2_p, b2_p, *,
                        hidden_dim, tile_b=2048, trim_output=True):
    """observed_data/uncertainties: (B, 3); params from prepare_params()."""
    B, F = observed_data.shape                 # F == 3
    F_pad, H_pad = w1_p.shape                  # (8, 128*k)

    # Pack both inputs into one lane-padded (B, F_pad) array -> a single K=8 dot
    # in the kernel and a single streamed input.  (This replaces the in-kernel
    # concat / split-W1 double-dot of earlier versions.)
    pad_cols = F_pad - 2 * F
    pieces = [observed_data.astype(jnp.float32), uncertainties.astype(jnp.float32)]
    if pad_cols:
        pieces.append(jnp.zeros((B, pad_cols), jnp.float32))
    x = jnp.concatenate(pieces, axis=1)

    TILE_B = _pick_tile_b(B, tile_b)
    grid = (pl.cdiv(B, TILE_B),)               # no batch padding; boundary block masked on store

    flops = 2 * B * (F_pad * H_pad + H_pad * H_pad)
    bytes_accessed = 4 * (x.size + w1_p.size + b1_p.size + w2_p.size + b2_p.size
                          + B * H_pad)

    out_padded = pl.pallas_call(
        recognition_kernel,
        out_shape=jax.ShapeDtypeStruct((B, H_pad), jnp.float32),
        grid_spec=pltpu.PrefetchScalarGridSpec(
            num_scalar_prefetch=0,
            grid=grid,
            in_specs=[
                pl.BlockSpec((TILE_B, F_pad), lambda i: (i, 0)),     # packed input tile (streamed)
                pl.BlockSpec((F_pad, H_pad), lambda i: (0, 0)),      # W1, VMEM-resident
                pl.BlockSpec((1, H_pad), lambda i: (0, 0)),          # b1, VMEM-resident
                pl.BlockSpec((H_pad, H_pad), lambda i: (0, 0)),      # W2, VMEM-resident
                pl.BlockSpec((1, H_pad), lambda i: (0, 0)),          # b2, VMEM-resident
            ],
            out_specs=pl.BlockSpec((TILE_B, H_pad), lambda i: (i, 0)),  # lane-dense 128-wide store
        ),
        compiler_params=pltpu.CompilerParams(
            dimension_semantics=("parallel",)),
        cost_estimate=pl.CostEstimate(flops=flops, transcendentals=0,
                                      bytes_accessed=bytes_accessed),
    )(x, w1_p, b1_p, w2_p, b2_p)

    if trim_output and hidden_dim != H_pad:
        # Columns >= hidden_dim are exact zeros; downstream code that tolerates the
        # padded width can pass trim_output=False and skip this copy entirely.
        return out_padded[:, :hidden_dim]
    return out_padded


def init_params(hidden_dim=64, seed=0):
    """Deterministic parameter init (PyTorch-Linear-like uniform fan-in scaling)."""
    key = jax.random.PRNGKey(seed)
    k1, k2, k3, k4 = jax.random.split(key, 4)
    in_dim = 3 * 2
    bound1 = 1.0 / jnp.sqrt(in_dim)
    bound2 = 1.0 / jnp.sqrt(hidden_dim)
    # Weights stored as (in, out) so the kernel does x @ W (== x @ W_torch.T).
    w1 = jax.random.uniform(k1, (in_dim, hidden_dim), jnp.float32, -bound1, bound1)
    b1 = jax.random.uniform(k2, (1, hidden_dim), jnp.float32, -bound1, bound1)
    w2 = jax.random.uniform(k3, (hidden_dim, hidden_dim), jnp.float32, -bound2, bound2)
    b2 = jax.random.uniform(k4, (1, hidden_dim), jnp.float32, -bound2, bound2)
    return w1, b1, w2, b2


if __name__ == "__main__":
    # TODO(synk): only forward() (the conditioning net) is kernelized; the nflows
    # autoregressive rational-quadratic-spline transform used by sample()/log_prob()
    # has no clean single-kernel Pallas equivalent and is out of scope of forward().
    hidden_dim = 64
    batch = 8

    key = jax.random.PRNGKey(0)
    k_obs, k_unc = jax.random.split(key)
    observed_data = jax.random.normal(k_obs, (batch, 3), jnp.float32)
    uncertainties = jax.random.normal(k_unc, (batch, 3), jnp.float32)

    w1, b1, w2, b2 = init_params(hidden_dim=hidden_dim, seed=0)

    # One-time parameter prep (hoisted out of the forward path).
    w1_p, b1_p, w2_p, b2_p = jax.tree_util.tree_map(
        jax.block_until_ready, prepare_params(w1, b1, w2, b2))

    out = recognition_forward(observed_data, uncertainties, w1_p, b1_p, w2_p, b2_p,
                              hidden_dim=hidden_dim)
    out = jax.block_until_ready(out)

    # Reference check in plain JAX (same math as the PyTorch module).
    x = jnp.concatenate([observed_data, uncertainties], axis=1)
    ref = jnp.maximum(jnp.maximum(x @ w1 + b1, 0.0) @ w2 + b2, 0.0)
    assert out.shape == (batch, hidden_dim)
    assert jnp.allclose(out, ref, atol=1e-5, rtol=1e-5)

    print("KERNEL_OK")
</pallas_src>

<mosaic_0001>
module attributes {stable_mosaic.version = 11 : i64} {
  func.func @recognition_kernel(%arg0: i32, %arg1: memref<8x8xf32, #tpu.memory_space<vmem>>, %arg2: memref<8x128xf32, #tpu.memory_space<vmem>>, %arg3: memref<1x128xf32, #tpu.memory_space<vmem>>, %arg4: memref<128x128xf32, #tpu.memory_space<vmem>>, %arg5: memref<1x128xf32, #tpu.memory_space<vmem>>, %arg6: memref<8x128xf32, #tpu.memory_space<vmem>>) attributes {dimension_semantics = [#tpu.dimension_semantics<parallel>], iteration_bounds = array<i64: 1>, scalar_prefetch = 0 : i64, scratch_operands = 0 : i64, tpu.core_type = #tpu.core_type<tc>, window_params = [{transform_indices = @transform_0, window_bounds = array<i64: 8, 8>}, {pipeline_mode = #tpu.pipeline_mode<synchronous>, transform_indices = @transform_1, window_bounds = array<i64: 8, 128>}, {pipeline_mode = #tpu.pipeline_mode<synchronous>, transform_indices = @transform_2, window_bounds = array<i64: 1, 128>}, {pipeline_mode = #tpu.pipeline_mode<synchronous>, transform_indices = @transform_3, window_bounds = array<i64: 128, 128>}, {pipeline_mode = #tpu.pipeline_mode<synchronous>, transform_indices = @transform_4, window_bounds = array<i64: 1, 128>}, {transform_indices = @transform_5, window_bounds = array<i64: 8, 128>}]} {
    %c0 = arith.constant 0 : index
    %c0_0 = arith.constant 0 : index
    %0 = vector.load %arg1[%c0, %c0_0] : memref<8x8xf32, #tpu.memory_space<vmem>>, vector<8x8xf32>
    %c0_1 = arith.constant 0 : index
    %c0_2 = arith.constant 0 : index
    %1 = vector.load %arg2[%c0_1, %c0_2] : memref<8x128xf32, #tpu.memory_space<vmem>>, vector<8x128xf32>
    %cst = arith.constant dense<0.000000e+00> : vector<8x128xf32>
    %2 = tpu.matmul %0, %1, %cst {dimension_numbers = #tpu.dot_dimension_numbers<[1], [0], [0], [1], [0, 0, 1, 1], [], []>} : vector<8x8xf32>, vector<8x128xf32>, vector<8x128xf32> -> vector<8x128xf32>
    %c0_3 = arith.constant 0 : index
    %c0_4 = arith.constant 0 : index
    %3 = vector.load %arg3[%c0_3, %c0_4] : memref<1x128xf32, #tpu.memory_space<vmem>>, vector<1x128xf32>
    %4 = vector.broadcast %3 : vector<1x128xf32> to vector<8x128xf32>
    %5 = arith.addf %2, %4 : vector<8x128xf32>
    %cst_5 = arith.constant 0.000000e+00 : f32
    %6 = vector.broadcast %cst_5 : f32 to vector<8x128xf32>
    %7 = arith.maximumf %5, %6 : vector<8x128xf32>
    %c0_6 = arith.constant 0 : index
    %c0_7 = arith.constant 0 : index
    %8 = vector.load %arg4[%c0_6, %c0_7] : memref<128x128xf32, #tpu.memory_space<vmem>>, vector<128x128xf32>
    %cst_8 = arith.constant dense<0.000000e+00> : vector<8x128xf32>
    %9 = tpu.matmul %7, %8, %cst_8 {dimension_numbers = #tpu.dot_dimension_numbers<[1], [0], [0], [1], [0, 0, 1, 1], [], []>} : vector<8x128xf32>, vector<128x128xf32>, vector<8x128xf32> -> vector<8x128xf32>
    %c0_9 = arith.constant 0 : index
    %c0_10 = arith.constant 0 : index
    %10 = vector.load %arg5[%c0_9, %c0_10] : memref<1x128xf32, #tpu.memory_space<vmem>>, vector<1x128xf32>
    %11 = vector.broadcast %10 : vector<1x128xf32> to vector<8x128xf32>
    %12 = arith.addf %9, %11 : vector<8x128xf32>
    %cst_11 = arith.constant 0.000000e+00 : f32
    %13 = vector.broadcast %cst_11 : f32 to vector<8x128xf32>
    %14 = arith.maximumf %12, %13 : vector<8x128xf32>
    %c0_12 = arith.constant 0 : index
    %c0_13 = arith.constant 0 : index
    %15 = vector.load %arg6[%c0_12, %c0_13] : memref<8x128xf32, #tpu.memory_space<vmem>>, vector<8x128xf32>
    tpu.vector_store %arg6[%c0_12, %c0_13], %14 {strides = array<i32>} : memref<8x128xf32, #tpu.memory_space<vmem>>, vector<8x128xf32>,
    return
  }
  func.func @transform_0(%arg0: i32) -> (i32, i32) {
    %c0_i32 = arith.constant 0 : i32
    %c0_i32_0 = arith.constant 0 : i32
    return %arg0, %c0_i32 : i32, i32
  }
  func.func @transform_1(%arg0: i32) -> (i32, i32) {
    %c0_i32 = arith.constant 0 : i32
    %c0_i32_0 = arith.constant 0 : i32
    %c0_i32_1 = arith.constant 0 : i32
    return %c0_i32, %c0_i32_0 : i32, i32
  }
  func.func @transform_2(%arg0: i32) -> (i32, i32) {
    %c0_i32 = arith.constant 0 : i32
    %c0_i32_0 = arith.constant 0 : i32
    %c0_i32_1 = arith.constant 0 : i32
    return %c0_i32, %c0_i32_0 : i32, i32
  }
  func.func @transform_3(%arg0: i32) -> (i32, i32) {
    %c0_i32 = arith.constant 0 : i32
    %c0_i32_0 = arith.constant 0 : i32
    %c0_i32_1 = arith.constant 0 : i32
    return %c0_i32, %c0_i32_0 : i32, i32
  }
  func.func @transform_4(%arg0: i32) -> (i32, i32) {
    %c0_i32 = arith.constant 0 : i32
    %c0_i32_0 = arith.constant 0 : i32
    %c0_i32_1 = arith.constant 0 : i32
    return %c0_i32, %c0_i32_0 : i32, i32
  }
  func.func @transform_5(%arg0: i32) -> (i32, i32) {
    %c0_i32 = arith.constant 0 : i32
    %c0_i32_0 = arith.constant 0 : i32
    return %arg0, %c0_i32 : i32, i32
  }
}

</mosaic_0001>

<llo_original>
// kernel: recognition_forward.1
$region0: #{recognition_forward.1}
  #allocation0 [shape = 'u32[]', space=smem, size = 0x4, offset = 0x4, fixed_abs, tag = 'smem constant byte address 0x4 - core index']
  #allocation1 [shape = 'u32[144,128]{1,0:T(1,128)}', space=vmem, size = 0x12000, scoped, tag = 'internal scratch']
  %s0 = inlined_call_operand.vmem [shape: f32[8,8], index: 0, kind: input, shape index: {}]
  %s1 = inlined_call_operand.vmem [shape: f32[8,128], index: 1, kind: input, shape index: {}]
  %s2 = inlined_call_operand.vmem [shape: f32[1,128], index: 2, kind: input, shape index: {}]
  %s3 = inlined_call_operand.hbm [shape: f32[128,128], index: 3, kind: input, shape index: {}]
  %s4 = inlined_call_operand.vmem [shape: f32[1,128], index: 4, kind: input, shape index: {}]
  %s5 = inlined_call_operand.hbm [shape: f32[8,128], index: 5, kind: output, shape index: {}]
  %s6 = sld [smem:[#allocation0]]
  $region34: #{recognition_forward.1} parent=0
    _
  %s8 = ssub.s32 1, %s6
  %s9 = scalar_select 0, %s8, %s6
  $region1: #{recognition_forward.1} parent=0
    #allocation2 [shape = 'u8[65536]{0}', space=vmem, size = 0x10000, scoped, tag = 'input window, operand 3, single buffered']
    #allocation3 [shape = 's32[1]{0}', space=sflag, size = 0x4, scoped, tag = 'scoped memory for recognition_forward.1']
    #allocation4 [shape = 's32[1]{0}', space=sflag, size = 0x4, scoped, tag = 'scoped memory for recognition_forward.1']
    #allocation5 [shape = 'u8[4096]{0}', space=vmem, size = 0x1000, scoped, tag = 'output window, operand 0, single buffered']
    %10 = vsyncpa [#allocation3], 0
    %11 = vsyncpa [#allocation4], 0
    // Predicated region
    $region2: #{recognition_forward.1} parent=1 // pred_check
      _
    $region3: #{recognition_forward.1} parent=1 // pred_check_branch
      %13 = sbr.rel (0) target = $region5
    $region4: #{recognition_forward.1} parent=1 // pred_region
      _
    $region5: #{recognition_forward.1} parent=1 // pred_fallthru
      _
    // Predicated region
    $region6: #{recognition_forward.1} parent=1 // pred_check
      _
    $region7: #{recognition_forward.1} parent=1 // pred_check_branch
      %15 = sbr.rel (0) target = $region9
    $region8: #{recognition_forward.1} parent=1 // pred_region
      _
    $region9: #{recognition_forward.1} parent=1 // pred_fallthru
      _
    // Predicated region
    $region10: #{recognition_forward.1} parent=1 // pred_check
      _
    $region11: #{recognition_forward.1} parent=1 // pred_check_branch
      %17 = sbr.rel (0) target = $region13
    $region12: #{recognition_forward.1} parent=1 // pred_region
      _
    $region13: #{recognition_forward.1} parent=1 // pred_fallthru
      _
    // Predicated region
    $region14: #{recognition_forward.1} parent=1 // pred_check
      _
    $region15: #{recognition_forward.1} parent=1 // pred_check_branch
      %19 = sbr.rel (0) target = $region17
    $region16: #{recognition_forward.1} parent=1 // pred_region
      %s21 = ssub.s32 2048, 2048
      %22 = vsyncadd [#allocation3], %s21
      %s23 = sshll.u32 [#allocation2], 4
      %s24 = int_to_ptr.vmem [resolvable:$true] %s23
      %29 = dma.hbm_to_vmem [thread:$0]  %s3, 2048, %s24, [#allocation3], 128, 128, 8
    $region17: #{recognition_forward.1} parent=1 // pred_fallthru
      _
    // Predicated region
    $region18: #{recognition_forward.1} parent=1 // pred_check
      _
    $region19: #{recognition_forward.1} parent=1 // pred_check_branch
      %31 = sbr.rel (0) target = $region21
    $region20: #{recognition_forward.1} parent=1 // pred_region
      _
    $region21: #{recognition_forward.1} parent=1 // pred_fallthru
      _
    // Predicated region
    $region22: #{recognition_forward.1} parent=1 // pred_check
      _
    $region23: #{recognition_forward.1} parent=1 // pred_check_branch
      %33 = sbr.rel (0) target = $region25
    $region24: #{recognition_forward.1} parent=1 // pred_region
      %34 = dma.done [#allocation3], 2048
    $region25: #{recognition_forward.1} parent=1 // pred_fallthru
      _
    %v35 = vld [vmem:[%s0] sm:$0xff]
    %v36 = vld [vmem:[%s1] sm:$0xff]
    %v37 = vld [vmem:[%s2] sm:$0x1]
    %v39 = vlaneseq
    %v40 = vshrl.u32 %v39, 7
    %v41 = vsub.s32 0, %v40
    %v42 = vrot.slane %v37, %v41
    %vm44 = vcmask 64512
    %v46 = vsel %vm44, %v35, 0
    %48 = vmatprep.subr.mxu0 0.0
    %49 = vmatpush1.msra.mxu0 0.0
    %50 = vmatprep.subr.mxu0 0.0
    %51 = vmatpush1.msra.mxu0 0.0
    %52 = vmatprep.subr.mxu0 0.0
    %53 = vmatpush1.msra.mxu0 0.0
    %54 = vmatprep.subr.mxu0 0.0
    %55 = vmatpush1.msra.mxu0 0.0
    %56 = vmatprep.subr.mxu0 0.0
    %57 = vmatpush1.msra.mxu0 0.0
    %58 = vmatprep.subr.mxu0 0.0
    %59 = vmatpush1.msra.mxu0 0.0
    %60 = vmatprep.subr.mxu0 0.0
    %61 = vmatpush1.msra.mxu0 0.0
    %62 = vmatprep.subr.mxu0 0.0
    %63 = vmatpush1.msra.mxu0 0.0
    %64 = vmatprep.subr.mxu0 0.0
    %65 = vmatpush1.msra.mxu0 0.0
    %66 = vmatprep.subr.mxu0 0.0
    %67 = vmatpush1.msra.mxu0 0.0
    %68 = vmatprep.subr.mxu0 0.0
    %69 = vmatpush1.msra.mxu0 0.0
    %70 = vmatprep.subr.mxu0 0.0
    %71 = vmatpush1.msra.mxu0 0.0
    %72 = vmatprep.subr.mxu0 0.0
    %73 = vmatpush1.msra.mxu0 0.0
    %74 = vmatprep.subr.mxu0 0.0
    %75 = vmatpush1.msra.mxu0 0.0
    %76 = vmatprep.subr.mxu0 0.0
    %77 = vmatpush1.msra.mxu0 0.0
    %78 = vmatprep.subr.mxu0 0.0
    %79 = vmatpush1.msra.mxu0 %v36
    %80 = vmatprep.subr.mxu0 0.0
    %81 = vmatpush2.msra.mxu0 0.0
    %82 = vmatprep.subr.mxu0 0.0
    %83 = vmatpush2.msra.mxu0 0.0
    %84 = vmatprep.subr.mxu0 0.0
    %85 = vmatpush2.msra.mxu0 0.0
    %86 = vmatprep.subr.mxu0 0.0
    %87 = vmatpush2.msra.mxu0 0.0
    %88 = vmatprep.subr.mxu0 0.0
    %89 = vmatpush2.msra.mxu0 0.0
    %90 = vmatprep.subr.mxu0 0.0
    %91 = vmatpush2.msra.mxu0 0.0
    %92 = vmatprep.subr.mxu0 0.0
    %93 = vmatpush2.msra.mxu0 0.0
    %94 = vmatprep.subr.mxu0 0.0
    %95 = vmatpush2.msra.mxu0 0.0
    %96 = vmatprep.subr.mxu0 0.0
    %97 = vmatpush2.msra.mxu0 0.0
    %98 = vmatprep.subr.mxu0 0.0
    %99 = vmatpush2.msra.mxu0 0.0
    %100 = vmatprep.subr.mxu0 0.0
    %101 = vmatpush2.msra.mxu0 0.0
    %102 = vmatprep.subr.mxu0 0.0
    %103 = vmatpush2.msra.mxu0 0.0
    %104 = vmatprep.subr.mxu0 0.0
    %105 = vmatpush2.msra.mxu0 0.0
    %106 = vmatprep.subr.mxu0 0.0
    %107 = vmatpush2.msra.mxu0 0.0
    %108 = vmatprep.subr.mxu0 0.0
    %109 = vmatpush2.msra.mxu0 0.0
    %110 = vmatprep.subr.mxu0 0.0
    %111 = vmatpush2.msra.mxu0 0.0
    %112 = vmatprep.mubr.f32.mxu0 0.0
    %113 = vmatmul.mubr.f32.gmra.mxu0 %v46
    %v114 = vpop.f32.mrf.mxu0
    %v115 = vadd.f32 %v42, %v114
    %v116 = vpop.f32.mrf.mxu0
    %117 = vdwg.mxu0
    %v118 = vmax.f32 %v115, 0.0
    %v119 = vld [vmem:[#allocation2] sm:$0xff]
    %v120 = vld [vmem:[#allocation2 + $0x8] sm:$0xff]
    %v121 = vld [vmem:[#allocation2 + $0x10] sm:$0xff]
    %v122 = vld [vmem:[#allocation2 + $0x18] sm:$0xff]
    %v123 = vld [vmem:[#allocation2 + $0x20] sm:$0xff]
    %v124 = vld [vmem:[#allocation2 + $0x28] sm:$0xff]
    %v125 = vld [vmem:[#allocation2 + $0x30] sm:$0xff]
    %v126 = vld [vmem:[#allocation2 + $0x38] sm:$0xff]
    %v127 = vld [vmem:[#allocation2 + $0x40] sm:$0xff]
    %v128 = vld [vmem:[#allocation2 + $0x48] sm:$0xff]
    %v129 = vld [vmem:[#allocation2 + $0x50] sm:$0xff]
    %v130 = vld [vmem:[#allocation2 + $0x58] sm:$0xff]
    %v131 = vld [vmem:[#allocation2 + $0x60] sm:$0xff]
    %v132 = vld [vmem:[#allocation2 + $0x68] sm:$0xff]
    %v133 = vld [vmem:[#allocation2 + $0x70] sm:$0xff]
    %v134 = vld [vmem:[#allocation2 + $0x78] sm:$0xff]
    %v135 = vld [vmem:[%s4] sm:$0x1]
    %v137 = vlaneseq
    %v138 = vshrl.u32 %v137, 7
    %v139 = vsub.s32 0, %v138
    %v140 = vrot.slane %v135, %v139
    %142 = vmatprep.subr.mxu0 0.0
    %143 = vmatpush1.msra.mxu0 %v134
    %144 = vmatprep.subr.mxu0 0.0
    %145 = vmatpush1.msra.mxu0 %v133
    %146 = vmatprep.subr.mxu0 0.0
    %147 = vmatpush1.msra.mxu0 %v132
    %148 = vmatprep.subr.mxu0 0.0
    %149 = vmatpush1.msra.mxu0 %v131
    %150 = vmatprep.subr.mxu0 0.0
    %151 = vmatpush1.msra.mxu0 %v130
    %152 = vmatprep.subr.mxu0 0.0
    %153 = vmatpush1.msra.mxu0 %v129
    %154 = vmatprep.subr.mxu0 0.0
    %155 = vmatpush1.msra.mxu0 %v128
    %156 = vmatprep.subr.mxu0 0.0
    %157 = vmatpush1.msra.mxu0 %v127
    %158 = vmatprep.subr.mxu0 0.0
    %159 = vmatpush1.msra.mxu0 %v126
    %160 = vmatprep.subr.mxu0 0.0
    %161 = vmatpush1.msra.mxu0 %v125
    %162 = vmatprep.subr.mxu0 0.0
    %163 = vmatpush1.msra.mxu0 %v124
    %164 = vmatprep.subr.mxu0 0.0
    %165 = vmatpush1.msra.mxu0 %v123
    %166 = vmatprep.subr.mxu0 0.0
    %167 = vmatpush1.msra.mxu0 %v122
    %168 = vmatprep.subr.mxu0 0.0
    %169 = vmatpush1.msra.mxu0 %v121
    %170 = vmatprep.subr.mxu0 0.0
    %171 = vmatpush1.msra.mxu0 %v120
    %172 = vmatprep.subr.mxu0 0.0
    %173 = vmatpush1.msra.mxu0 %v119
    %174 = vmatprep.subr.mxu0 0.0
    %175 = vmatpush2.msra.mxu0 0.0
    %176 = vmatprep.subr.mxu0 0.0
    %177 = vmatpush2.msra.mxu0 0.0
    %178 = vmatprep.subr.mxu0 0.0
    %179 = vmatpush2.msra.mxu0 0.0
    %180 = vmatprep.subr.mxu0 0.0
    %181 = vmatpush2.msra.mxu0 0.0
    %182 = vmatprep.subr.mxu0 0.0
    %183 = vmatpush2.msra.mxu0 0.0
    %184 = vmatprep.subr.mxu0 0.0
    %185 = vmatpush2.msra.mxu0 0.0
    %186 = vmatprep.subr.mxu0 0.0
    %187 = vmatpush2.msra.mxu0 0.0
    %188 = vmatprep.subr.mxu0 0.0
    %189 = vmatpush2.msra.mxu0 0.0
    %190 = vmatprep.subr.mxu0 0.0
    %191 = vmatpush2.msra.mxu0 0.0
    %192 = vmatprep.subr.mxu0 0.0
    %193 = vmatpush2.msra.mxu0 0.0
    %194 = vmatprep.subr.mxu0 0.0
    %195 = vmatpush2.msra.mxu0 0.0
    %196 = vmatprep.subr.mxu0 0.0
    %197 = vmatpush2.msra.mxu0 0.0
    %198 = vmatprep.subr.mxu0 0.0
    %199 = vmatpush2.msra.mxu0 0.0
    %200 = vmatprep.subr.mxu0 0.0
    %201 = vmatpush2.msra.mxu0 0.0
    %202 = vmatprep.subr.mxu0 0.0
    %203 = vmatpush2.msra.mxu0 0.0
    %204 = vmatprep.subr.mxu0 0.0
    %205 = vmatpush2.msra.mxu0 0.0
    %206 = vmatprep.mubr.f32.mxu0 0.0
    %207 = vmatmul.mubr.f32.gmra.mxu0 %v118
    %v208 = vpop.f32.mrf.mxu0
    %v209 = vadd.f32 %v140, %v208
    %v210 = vpop.f32.mrf.mxu0
    %211 = vdwg.mxu0
    %v212 = vmax.f32 %v209, 0.0
    %213 = vst [vmem:[#allocation5] sm:$0xff] %v212
    // Predicated region
    $region26: #{recognition_forward.1} parent=1 // pred_check
      _
    $region27: #{recognition_forward.1} parent=1 // pred_check_branch
      %215 = sbr.rel (0) target = $region29
    $region28: #{recognition_forward.1} parent=1 // pred_region
      %s217 = ssub.s32 128, 128
      %218 = vsyncadd [#allocation4], %s217
      %s220 = sshll.u32 [#allocation5], 4
      %s221 = int_to_ptr.vmem [resolvable:$true] %s220
      %223 = dma.vmem_to_hbm [thread:$0]  %s221, 128, %s5, [#allocation4]
    $region29: #{recognition_forward.1} parent=1 // pred_fallthru
      _
    // Predicated region
    $region30: #{recognition_forward.1} parent=1 // pred_check
      _
    $region31: #{recognition_forward.1} parent=1 // pred_check_branch
      %225 = sbr.rel (0) target = $region33
    $region32: #{recognition_forward.1} parent=1 // pred_region
      %226 = dma.done [#allocation4], 128
    $region33: #{recognition_forward.1} parent=1 // pred_fallthru
      _
    %227 = vsyncpa [#allocation3], 1
    %228 = vsyncpa [#allocation4], 1

</llo_original>
